<compile_context>
chip_gen: v5e
topology: v5e:2x2
jax: 0.10.0
libtpu: 0.0.40
codegen_flags: <defaults>
</compile_context>

<pallas_src>
import math
import jax
import jax.numpy as jnp
from jax.experimental import pallas as pl
from jax.experimental.pallas import tpu as pltpu


# --------------------------------------------------------------------------- #
# Helpers
# --------------------------------------------------------------------------- #
def _round_up(a, b):
    return (a + b - 1) // b * b


def _vmem_capacity_bytes():
    """Physical VMEM per TensorCore; conservative fallback if query fails."""
    try:
        info = pltpu.get_tpu_info()
        for name in ("vmem_capacity_bytes", "vmem_bytes", "vmem_size_bytes"):
            v = getattr(info, name, None)
            if v:
                return int(v)
    except Exception:
        pass
    return 64 * 1024 * 1024  # v7x per-TC; safe lower bound for v5e/v6e too


def _choose_tm(M, tm_max):
    """Row tile: multiple of 16 (bf16 packing); prefer >= 2 row tiles."""
    tm = min(tm_max, _round_up(max(M, 1), 16))
    tm = max(16, _round_up(tm, 16))
    # If a single tile would cover all rows but M is splittable, halve it so
    # the 'parallel' row axis can shard across both TensorCores (v7x).
    if M > 16 and _round_up(M, tm) == tm:
        tm = max(16, _round_up((M + 1) // 2, 16))
    return tm


def _resident_vmem_bytes(tm, Dp, Hp, ib, ob):
    # Conservative: count double buffers for every input spec.
    return (2 * 2 * Dp * Hp * ib          # w_fc + w_proj (resident)
            + 2 * tm * Dp * ib            # x row tile
            + 2 * tm * Dp * ob            # output row tile
            + tm * Hp * (4 + ib))         # f32 h + cast copy


def _streamed_vmem_bytes(tm, th, Dp, ib, ob, use_acc):
    return (2 * 2 * Dp * th * ib          # w_fc col tile + w_proj row tile
            + 2 * tm * Dp * ib            # x row tile
            + 2 * tm * Dp * ob            # output row tile
            + (tm * Dp * 4 if use_acc else 0)
            + tm * th * (4 + ib))         # f32 h + cast copy


# --------------------------------------------------------------------------- #
# Kernels
# --------------------------------------------------------------------------- #
def mlp_resident_kernel(x_ref, wfc_ref, wproj_ref, o_ref):
    # Grid = (i over row tiles,). Weights are full arrays, resident in VMEM.
    h = jnp.dot(x_ref[...], wfc_ref[...], preferred_element_type=jnp.float32)
    h = jnp.maximum(h, 0.0)
    h = h * h
    o_ref[...] = jnp.dot(h.astype(wproj_ref.dtype), wproj_ref[...],
                         preferred_element_type=jnp.float32).astype(o_ref.dtype)


def mlp_streamed_kernel_f32out(x_ref, wfc_ref, wproj_ref, o_ref):
    # Grid = (i rows [parallel], k hidden tiles [reduction]).
    # f32 output block is resident across k -> accumulate into it directly.
    k = pl.program_id(1)

    @pl.when(k == 0)
    def _():
        o_ref[...] = jnp.zeros_like(o_ref)

    h = jnp.dot(x_ref[...], wfc_ref[...], preferred_element_type=jnp.float32)
    h = jnp.maximum(h, 0.0)
    h = h * h
    o_ref[...] += jnp.dot(h.astype(wproj_ref.dtype), wproj_ref[...],
                          preferred_element_type=jnp.float32)


def mlp_streamed_kernel_acc(x_ref, wfc_ref, wproj_ref, o_ref, acc_ref):
    # Same as above, but with an f32 scratch accumulator for non-f32 outputs.
    k = pl.program_id(1)

    @pl.when(k == 0)
    def _():
        acc_ref[...] = jnp.zeros_like(acc_ref)

    h = jnp.dot(x_ref[...], wfc_ref[...], preferred_element_type=jnp.float32)
    h = jnp.maximum(h, 0.0)
    h = h * h
    acc_ref[...] += jnp.dot(h.astype(wproj_ref.dtype), wproj_ref[...],
                            preferred_element_type=jnp.float32)

    @pl.when(k == pl.num_programs(1) - 1)
    def _():
        o_ref[...] = acc_ref[...].astype(o_ref.dtype)


# --------------------------------------------------------------------------- #
# Wrappers
# --------------------------------------------------------------------------- #
def prepare_mlp_weights(w_fc, w_proj, compute_dtype):
    """Cast + pad the weights ONCE (hoisted out of the per-call path).

    w_fc:   [D, H]  (== torch c_fc.weight.T)
    w_proj: [H, D]  (== torch c_proj.weight.T)
    """
    D, H = w_fc.shape
    assert w_proj.shape == (H, D)
    Dp = _round_up(D, 256)   # lane dim: multiple of 256 (v6e/v7x MXU width)
    Hp = _round_up(H, 512)   # divisible by every streamed hidden tile size
    w_fc_p = jnp.pad(w_fc.astype(compute_dtype), ((0, Dp - D), (0, Hp - H)))
    w_proj_p = jnp.pad(w_proj.astype(compute_dtype), ((0, Hp - H), (0, Dp - D)))
    return (w_fc_p, w_proj_p, D, H)


def _mlp_pallas(x2d, w_fc_p, w_proj_p, D):
    """x2d: [M, D]; w_fc_p: [Dp, Hp]; w_proj_p: [Hp, Dp]. Returns [M, D]."""
    M = x2d.shape[0]
    Dp, Hp = w_fc_p.shape
    dtype = x2d.dtype
    out_dtype = dtype
    ib = jnp.dtype(dtype).itemsize
    ob = jnp.dtype(out_dtype).itemsize

    budget = int(0.75 * _vmem_capacity_bytes())   # headroom for compiler scratch

    # ---- choose resident vs streamed + tile sizes --------------------------
    tm_res = _choose_tm(M, 256)
    resident = _resident_vmem_bytes(tm_res, Dp, Hp, ib, ob) <= budget

    if resident:
        tm = tm_res
        th = None
    else:
        use_acc = jnp.dtype(out_dtype) != jnp.dtype(jnp.float32)
        chosen = None
        m_cap = _round_up(max(M, 1), 16)
        for cand_tm in (1024, 768, 512, 384, 256, 128, 64, 32, 16):
            if cand_tm > m_cap:
                continue
            for cand_th in (512, 256, 128):
                if Hp % cand_th:
                    continue
                if _streamed_vmem_bytes(cand_tm, cand_th, Dp, ib, ob,
                                        use_acc) <= budget:
                    chosen = (cand_tm, cand_th)
                    break
            if chosen is not None:
                break
        if chosen is None:
            chosen = (16, 128)   # minimal tiles; let the compiler try
        tm, th = chosen

    # ---- pad activations to the tile grid (zeros contribute nothing) -------
    Mp = _round_up(M, tm)
    if (Mp, Dp) != (M, D):
        x2d = jnp.pad(x2d, ((0, Mp - M), (0, Dp - D)))

    if resident:
        out = pl.pallas_call(
            mlp_resident_kernel,
            out_shape=jax.ShapeDtypeStruct((Mp, Dp), out_dtype),
            grid_spec=pltpu.PrefetchScalarGridSpec(
                num_scalar_prefetch=0,
                grid=(Mp // tm,),
                in_specs=[
                    pl.BlockSpec((tm, Dp), lambda i: (i, 0)),   # x row tile
                    pl.BlockSpec((Dp, Hp), lambda i: (0, 0)),   # w_fc (resident)
                    pl.BlockSpec((Hp, Dp), lambda i: (0, 0)),   # w_proj (resident)
                ],
                out_specs=pl.BlockSpec((tm, Dp), lambda i: (i, 0)),
            ),
            compiler_params=pltpu.CompilerParams(
                dimension_semantics=("parallel",),
                vmem_limit_bytes=budget,
            ),
        )(x2d, w_fc_p, w_proj_p)
    else:
        if jnp.dtype(out_dtype) == jnp.dtype(jnp.float32):
            kernel = mlp_streamed_kernel_f32out
            scratch = []
        else:
            kernel = mlp_streamed_kernel_acc
            scratch = [pltpu.VMEM((tm, Dp), jnp.float32)]
        out = pl.pallas_call(
            kernel,
            out_shape=jax.ShapeDtypeStruct((Mp, Dp), out_dtype),
            grid_spec=pltpu.PrefetchScalarGridSpec(
                num_scalar_prefetch=0,
                grid=(Mp // tm, Hp // th),
                in_specs=[
                    pl.BlockSpec((tm, Dp), lambda i, k: (i, 0)),   # x row tile
                    pl.BlockSpec((Dp, th), lambda i, k: (0, k)),   # w_fc col tile
                    pl.BlockSpec((th, Dp), lambda i, k: (k, 0)),   # w_proj row tile
                ],
                out_specs=pl.BlockSpec((tm, Dp), lambda i, k: (i, 0)),
                scratch_shapes=scratch,
            ),
            compiler_params=pltpu.CompilerParams(
                dimension_semantics=("parallel", "arbitrary"),
                vmem_limit_bytes=budget,
            ),
        )(x2d, w_fc_p, w_proj_p)

    if (Mp, Dp) != (M, D):
        out = out[:M, :D]
    return out


def mlp_apply(x, prepared):
    """x: [..., D] -> [..., D] using pre-cast, pre-padded weights."""
    w_fc_p, w_proj_p, D, _H = prepared
    assert x.shape[-1] == D
    lead = x.shape[:-1]
    y2d = _mlp_pallas(x.reshape(-1, D), w_fc_p, w_proj_p, D)
    return y2d.reshape(*lead, D)


def mlp_forward(x, w_fc, w_proj):
    """Convenience one-shot wrapper matching MLP.forward (CastedLinear casts
    the weights to the activation dtype). For repeated calls, use
    prepare_mlp_weights() once + mlp_apply() to avoid re-casting/padding."""
    prepared = prepare_mlp_weights(w_fc, w_proj, x.dtype)
    return mlp_apply(x, prepared)


# --------------------------------------------------------------------------- #
# Self-test
# --------------------------------------------------------------------------- #
if __name__ == "__main__":
    key = jax.random.PRNGKey(0)
    k_x, k_fc, k_pj = jax.random.split(key, 3)

    # Small shapes consistent with the module: batch=2, seq=8, dim=32.
    B, S, dim = 2, 8, 32
    hidden = 4 * dim

    x = jax.random.normal(k_x, (B, S, dim), dtype=jnp.float32)

    # Deterministic param init mirroring nn.Linear's kaiming-uniform bound
    # (bound = 1/sqrt(in_features)); stored already transposed to [in, out].
    bound_fc = 1.0 / math.sqrt(dim)
    w_fc = jax.random.uniform(k_fc, (dim, hidden), dtype=jnp.float32,
                              minval=-bound_fc, maxval=bound_fc)
    # Module-faithful init: c_proj.weight.data.zero_()
    w_proj_zero = jnp.zeros((hidden, dim), dtype=jnp.float32)

    def ref(xv, wf, wp):
        h = jnp.maximum(xv.reshape(-1, dim) @ wf, 0.0) ** 2
        return (h @ wp).reshape(xv.shape)

    # 1) Module-faithful run (zero-initialized c_proj), prepared-weight API.
    prep_zero = prepare_mlp_weights(w_fc, w_proj_zero, jnp.float32)
    y = mlp_apply(x, prep_zero)
    jax.block_until_ready(y)
    assert y.shape == (B, S, dim)
    assert jnp.allclose(y, ref(x, w_fc, w_proj_zero), atol=1e-5), \
        "mismatch (zero proj)"

    # 2) Non-trivial c_proj weights to exercise the second matmul.
    bound_pj = 1.0 / math.sqrt(hidden)
    w_proj = jax.random.uniform(k_pj, (hidden, dim), dtype=jnp.float32,
                                minval=-bound_pj, maxval=bound_pj)
    prep_f32 = prepare_mlp_weights(w_fc, w_proj, jnp.float32)
    y = mlp_apply(x, prep_f32)
    jax.block_until_ready(y)
    assert jnp.allclose(y, ref(x, w_fc, w_proj), atol=1e-4, rtol=1e-4), \
        "mismatch vs f32 reference"

    # 3) bf16 activations (CastedLinear casts the weights down too).
    y_bf16 = mlp_forward(x.astype(jnp.bfloat16), w_fc, w_proj)
    jax.block_until_ready(y_bf16)
    y_bf16_ref = ref(x.astype(jnp.bfloat16).astype(jnp.float32),
                     w_fc.astype(jnp.bfloat16).astype(jnp.float32),
                     w_proj.astype(jnp.bfloat16).astype(jnp.float32))
    assert jnp.all(jnp.isfinite(y_bf16.astype(jnp.float32)))
    assert jnp.allclose(y_bf16.astype(jnp.float32), y_bf16_ref,
                        atol=1e-1, rtol=1e-1), "mismatch vs bf16 reference"

    print("KERNEL_OK")
</pallas_src>

<mosaic_0001>
module attributes {stable_mosaic.version = 11 : i64} {
  func.func @mlp_resident_kernel(%arg0: i32, %arg1: memref<16x256xf32, #tpu.memory_space<vmem>>, %arg2: memref<256x512xf32, #tpu.memory_space<vmem>>, %arg3: memref<512x256xf32, #tpu.memory_space<vmem>>, %arg4: memref<16x256xf32, #tpu.memory_space<vmem>>) attributes {dimension_semantics = [#tpu.dimension_semantics<parallel>], iteration_bounds = array<i64: 1>, scalar_prefetch = 0 : i64, scratch_operands = 0 : i64, tpu.core_type = #tpu.core_type<tc>, window_params = [{transform_indices = @transform_0, window_bounds = array<i64: 16, 256>}, {pipeline_mode = #tpu.pipeline_mode<synchronous>, transform_indices = @transform_1, window_bounds = array<i64: 256, 512>}, {pipeline_mode = #tpu.pipeline_mode<synchronous>, transform_indices = @transform_2, window_bounds = array<i64: 512, 256>}, {transform_indices = @transform_3, window_bounds = array<i64: 16, 256>}]} {
    %c0 = arith.constant 0 : index
    %c0_0 = arith.constant 0 : index
    %0 = vector.load %arg1[%c0, %c0_0] : memref<16x256xf32, #tpu.memory_space<vmem>>, vector<16x256xf32>
    %c0_1 = arith.constant 0 : index
    %c0_2 = arith.constant 0 : index
    %1 = vector.load %arg2[%c0_1, %c0_2] : memref<256x512xf32, #tpu.memory_space<vmem>>, vector<256x512xf32>
    %cst = arith.constant dense<0.000000e+00> : vector<16x512xf32>
    %2 = tpu.matmul %0, %1, %cst {dimension_numbers = #tpu.dot_dimension_numbers<[1], [0], [0], [1], [0, 0, 1, 1], [], []>} : vector<16x256xf32>, vector<256x512xf32>, vector<16x512xf32> -> vector<16x512xf32>
    %cst_3 = arith.constant 0.000000e+00 : f32
    %3 = vector.broadcast %cst_3 : f32 to vector<16x512xf32>
    %4 = arith.maximumf %2, %3 : vector<16x512xf32>
    %5 = arith.mulf %4, %4 : vector<16x512xf32>
    %c0_4 = arith.constant 0 : index
    %c0_5 = arith.constant 0 : index
    %6 = vector.load %arg3[%c0_4, %c0_5] : memref<512x256xf32, #tpu.memory_space<vmem>>, vector<512x256xf32>
    %cst_6 = arith.constant dense<0.000000e+00> : vector<16x256xf32>
    %7 = tpu.matmul %5, %6, %cst_6 {dimension_numbers = #tpu.dot_dimension_numbers<[1], [0], [0], [1], [0, 0, 1, 1], [], []>} : vector<16x512xf32>, vector<512x256xf32>, vector<16x256xf32> -> vector<16x256xf32>
    %c0_7 = arith.constant 0 : index
    %c0_8 = arith.constant 0 : index
    %8 = vector.load %arg4[%c0_7, %c0_8] : memref<16x256xf32, #tpu.memory_space<vmem>>, vector<16x256xf32>
    tpu.vector_store %arg4[%c0_7, %c0_8], %7 {strides = array<i32>} : memref<16x256xf32, #tpu.memory_space<vmem>>, vector<16x256xf32>,
    return
  }
  func.func @transform_0(%arg0: i32) -> (i32, i32) {
    %c0_i32 = arith.constant 0 : i32
    %c0_i32_0 = arith.constant 0 : i32
    return %arg0, %c0_i32 : i32, i32
  }
  func.func @transform_1(%arg0: i32) -> (i32, i32) {
    %c0_i32 = arith.constant 0 : i32
    %c0_i32_0 = arith.constant 0 : i32
    %c0_i32_1 = arith.constant 0 : i32
    return %c0_i32, %c0_i32_0 : i32, i32
  }
  func.func @transform_2(%arg0: i32) -> (i32, i32) {
    %c0_i32 = arith.constant 0 : i32
    %c0_i32_0 = arith.constant 0 : i32
    %c0_i32_1 = arith.constant 0 : i32
    return %c0_i32, %c0_i32_0 : i32, i32
  }
  func.func @transform_3(%arg0: i32) -> (i32, i32) {
    %c0_i32 = arith.constant 0 : i32
    %c0_i32_0 = arith.constant 0 : i32
    return %arg0, %c0_i32 : i32, i32
  }
}

</mosaic_0001>

<llo_original>
// kernel: tpu_custom_call.1
$region0: #{tpu_custom_call.1}
  #allocation0 [shape = 'u32[]', space=smem, size = 0x4, offset = 0x4, fixed_abs, tag = 'smem constant byte address 0x4 - core index']
  #allocation1 [shape = 'u32[72,128]{1,0:T(1,128)}', space=vmem, size = 0x9000, scoped, tag = 'internal scratch']
  %s0 = inlined_call_operand.hbm [shape: f32[16,256], index: 0, kind: input, shape index: {}]
  %s1 = inlined_call_operand.hbm [shape: f32[256,512], index: 1, kind: input, shape index: {}]
  %s2 = inlined_call_operand.hbm [shape: f32[512,256], index: 2, kind: input, shape index: {}]
  %s3 = inlined_call_operand.hbm [shape: f32[16,256], index: 3, kind: output, shape index: {}]
  %s4 = sld [smem:[#allocation0]]
  $region34: #{tpu_custom_call.1} parent=0
    _
  %s6 = ssub.s32 1, %s4
  %s7 = scalar_select 0, %s6, %s4
  $region1: #{tpu_custom_call.1} parent=0
    #allocation2 [shape = 'u8[16384]{0}', space=vmem, size = 0x4000, scoped, tag = 'input window, operand 0, single buffered']
    #allocation3 [shape = 's32[1]{0}', space=sflag, size = 0x4, scoped, tag = 'scoped memory for tpu_custom_call.1']
    #allocation4 [shape = 's32[1]{0}', space=sflag, size = 0x4, scoped, tag = 'scoped memory for tpu_custom_call.1']
    #allocation5 [shape = 'u8[524288]{0}', space=vmem, size = 0x80000, scoped, tag = 'input window, operand 1, single buffered']
    #allocation6 [shape = 's32[1]{0}', space=sflag, size = 0x4, scoped, tag = 'scoped memory for tpu_custom_call.1']
    #allocation7 [shape = 'u8[524288]{0}', space=vmem, size = 0x80000, scoped, tag = 'input window, operand 2, single buffered']
    #allocation8 [shape = 'u8[16384]{0}', space=vmem, size = 0x4000, scoped, tag = 'output window, operand 0, single buffered']
    %8 = vsyncpa [#allocation3], 0
    %9 = vsyncpa [#allocation6], 0
    %10 = vsyncpa [#allocation4], 0
    // Predicated region
    $region2: #{tpu_custom_call.1} parent=1 // pred_check
      _
    $region3: #{tpu_custom_call.1} parent=1 // pred_check_branch
      %12 = sbr.rel (0) target = $region5
    $region4: #{tpu_custom_call.1} parent=1 // pred_region
      %14 = vsyncadd [#allocation3], 0
      %s15 = sshll.u32 %s0, 4
      %s16 = int_to_ptr.hbm [resolvable:$true] %s15
      %s17 = sshll.u32 [#allocation2], 4
      %s18 = int_to_ptr.vmem [resolvable:$true] %s17
      %23 = dma.hbm_to_vmem [thread:$0]  %s16, 512, %s18, [#allocation3], 256, 256, 16
    $region5: #{tpu_custom_call.1} parent=1 // pred_fallthru
      _
    // Predicated region
    $region6: #{tpu_custom_call.1} parent=1 // pred_check
      _
    $region7: #{tpu_custom_call.1} parent=1 // pred_check_branch
      %25 = sbr.rel (0) target = $region9
    $region8: #{tpu_custom_call.1} parent=1 // pred_region
      %27 = vsyncadd [#allocation6], 0
      %s28 = sshll.u32 %s1, 4
      %s29 = int_to_ptr.hbm [resolvable:$true] %s28
      %s30 = sshll.u32 [#allocation5], 4
      %s31 = int_to_ptr.vmem [resolvable:$true] %s30
      %36 = dma.hbm_to_vmem [thread:$0]  %s29, 16384, %s31, [#allocation6], 512, 512, 32
    $region9: #{tpu_custom_call.1} parent=1 // pred_fallthru
      _
    // Predicated region
    $region10: #{tpu_custom_call.1} parent=1 // pred_check
      _
    $region11: #{tpu_custom_call.1} parent=1 // pred_check_branch
      %38 = sbr.rel (0) target = $region13
    $region12: #{tpu_custom_call.1} parent=1 // pred_region
      %40 = vsyncadd [#allocation6], 0
      %s41 = sshll.u32 %s2, 4
      %s42 = int_to_ptr.hbm [resolvable:$true] %s41
      %s43 = sshll.u32 [#allocation7], 4
      %s44 = int_to_ptr.vmem [resolvable:$true] %s43
      %49 = dma.hbm_to_vmem [thread:$0]  %s42, 16384, %s44, [#allocation6], 256, 256, 16
    $region13: #{tpu_custom_call.1} parent=1 // pred_fallthru
      _
    // Predicated region
    $region14: #{tpu_custom_call.1} parent=1 // pred_check
      _
    $region15: #{tpu_custom_call.1} parent=1 // pred_check_branch
      %51 = sbr.rel (0) target = $region17
    $region16: #{tpu_custom_call.1} parent=1 // pred_region
      %53 = dma.done [#allocation3], 512
    $region17: #{tpu_custom_call.1} parent=1 // pred_fallthru
      _
    // Predicated region
    $region18: #{tpu_custom_call.1} parent=1 // pred_check
      _
    $region19: #{tpu_custom_call.1} parent=1 // pred_check_branch
      %55 = sbr.rel (0) target = $region21
    $region20: #{tpu_custom_call.1} parent=1 // pred_region
      %57 = dma.done [#allocation6], 16384
    $region21: #{tpu_custom_call.1} parent=1 // pred_fallthru
      _
    // Predicated region
    $region22: #{tpu_custom_call.1} parent=1 // pred_check
      _
    $region23: #{tpu_custom_call.1} parent=1 // pred_check_branch
      %59 = sbr.rel (0) target = $region25
    $region24: #{tpu_custom_call.1} parent=1 // pred_region
      %61 = dma.done [#allocation6], 16384
    $region25: #{tpu_custom_call.1} parent=1 // pred_fallthru
      _
    %v62 = vld [vmem:[#allocation2] sm:$0xff]
    %v63 = vld [vmem:[#allocation2 + $0x8] sm:$0xff]
    %v64 = vld [vmem:[#allocation2 + $0x10] sm:$0xff]
    %v65 = vld [vmem:[#allocation2 + $0x18] sm:$0xff]
    %v66 = vld [vmem:[#allocation5] sm:$0xff]
    %v67 = vld [vmem:[#allocation5 + $0x8] sm:$0xff]
    %v68 = vld [vmem:[#allocation5 + $0x10] sm:$0xff]
    %v69 = vld [vmem:[#allocation5 + $0x18] sm:$0xff]
    %v70 = vld [vmem:[#allocation5 + $0x20] sm:$0xff]
    %v71 = vld [vmem:[#allocation5 + $0x28] sm:$0xff]
    %v72 = vld [vmem:[#allocation5 + $0x30] sm:$0xff]
    %v73 = vld [vmem:[#allocation5 + $0x38] sm:$0xff]
    %v74 = vld [vmem:[#allocation5 + $0x40] sm:$0xff]
    %v75 = vld [vmem:[#allocation5 + $0x48] sm:$0xff]
    %v76 = vld [vmem:[#allocation5 + $0x50] sm:$0xff]
    %v77 = vld [vmem:[#allocation5 + $0x58] sm:$0xff]
    %v78 = vld [vmem:[#allocation5 + $0x60] sm:$0xff]
    %v79 = vld [vmem:[#allocation5 + $0x68] sm:$0xff]
    %v80 = vld [vmem:[#allocation5 + $0x70] sm:$0xff]
    %v81 = vld [vmem:[#allocation5 + $0x78] sm:$0xff]
    %v82 = vld [vmem:[#allocation5 + $0x80] sm:$0xff]
    %v83 = vld [vmem:[#allocation5 + $0x88] sm:$0xff]
    %v84 = vld [vmem:[#allocation5 + $0x90] sm:$0xff]
    %v85 = vld [vmem:[#allocation5 + $0x98] sm:$0xff]
    %v86 = vld [vmem:[#allocation5 + $0xa0] sm:$0xff]
    %v87 = vld [vmem:[#allocation5 + $0xa8] sm:$0xff]
    %v88 = vld [vmem:[#allocation5 + $0xb0] sm:$0xff]
    %v89 = vld [vmem:[#allocation5 + $0xb8] sm:$0xff]
    %v90 = vld [vmem:[#allocation5 + $0xc0] sm:$0xff]
    %v91 = vld [vmem:[#allocation5 + $0xc8] sm:$0xff]
    %v92 = vld [vmem:[#allocation5 + $0xd0] sm:$0xff]
    %v93 = vld [vmem:[#allocation5 + $0xd8] sm:$0xff]
    %v94 = vld [vmem:[#allocation5 + $0xe0] sm:$0xff]
    %v95 = vld [vmem:[#allocation5 + $0xe8] sm:$0xff]
    %v96 = vld [vmem:[#allocation5 + $0xf0] sm:$0xff]
    %v97 = vld [vmem:[#allocation5 + $0xf8] sm:$0xff]
    %v98 = vld [vmem:[#allocation5 + $0x100] sm:$0xff]
    %v99 = vld [vmem:[#allocation5 + $0x108] sm:$0xff]
    %v100 = vld [vmem:[#allocation5 + $0x110] sm:$0xff]
    %v101 = vld [vmem:[#allocation5 + $0x118] sm:$0xff]
    %v102 = vld [vmem:[#allocation5 + $0x120] sm:$0xff]
    %v103 = vld [vmem:[#allocation5 + $0x128] sm:$0xff]
    %v104 = vld [vmem:[#allocation5 + $0x130] sm:$0xff]
    %v105 = vld [vmem:[#allocation5 + $0x138] sm:$0xff]
    %v106 = vld [vmem:[#allocation5 + $0x140] sm:$0xff]
    %v107 = vld [vmem:[#allocation5 + $0x148] sm:$0xff]
    %v108 = vld [vmem:[#allocation5 + $0x150] sm:$0xff]
    %v109 = vld [vmem:[#allocation5 + $0x158] sm:$0xff]
    %v110 = vld [vmem:[#allocation5 + $0x160] sm:$0xff]
    %v111 = vld [vmem:[#allocation5 + $0x168] sm:$0xff]
    %v112 = vld [vmem:[#allocation5 + $0x170] sm:$0xff]
    %v113 = vld [vmem:[#allocation5 + $0x178] sm:$0xff]
    %v114 = vld [vmem:[#allocation5 + $0x180] sm:$0xff]
    %v115 = vld [vmem:[#allocation5 + $0x188] sm:$0xff]
    %v116 = vld [vmem:[#allocation5 + $0x190] sm:$0xff]
    %v117 = vld [vmem:[#allocation5 + $0x198] sm:$0xff]
    %v118 = vld [vmem:[#allocation5 + $0x1a0] sm:$0xff]
    %v119 = vld [vmem:[#allocation5 + $0x1a8] sm:$0xff]
    %v120 = vld [vmem:[#allocation5 + $0x1b0] sm:$0xff]
    %v121 = vld [vmem:[#allocation5 + $0x1b8] sm:$0xff]
    %v122 = vld [vmem:[#allocation5 + $0x1c0] sm:$0xff]
    %v123 = vld [vmem:[#allocation5 + $0x1c8] sm:$0xff]
    %v124 = vld [vmem:[#allocation5 + $0x1d0] sm:$0xff]
    %v125 = vld [vmem:[#allocation5 + $0x1d8] sm:$0xff]
    %v126 = vld [vmem:[#allocation5 + $0x1e0] sm:$0xff]
    %v127 = vld [vmem:[#allocation5 + $0x1e8] sm:$0xff]
    %v128 = vld [vmem:[#allocation5 + $0x1f0] sm:$0xff]
    %v129 = vld [vmem:[#allocation5 + $0x1f8] sm:$0xff]
    %v130 = vld [vmem:[#allocation5 + $0x200] sm:$0xff]
    %v131 = vld [vmem:[#allocation5 + $0x208] sm:$0xff]
    %v132 = vld [vmem:[#allocation5 + $0x210] sm:$0xff]
    %v133 = vld [vmem:[#allocation5 + $0x218] sm:$0xff]
    %v134 = vld [vmem:[#allocation5 + $0x220] sm:$0xff]
    %v135 = vld [vmem:[#allocation5 + $0x228] sm:$0xff]
    %v136 = vld [vmem:[#allocation5 + $0x230] sm:$0xff]
    %v137 = vld [vmem:[#allocation5 + $0x238] sm:$0xff]
    %v138 = vld [vmem:[#allocation5 + $0x240] sm:$0xff]
    %v139 = vld [vmem:[#allocation5 + $0x248] sm:$0xff]
    %v140 = vld [vmem:[#allocation5 + $0x250] sm:$0xff]
    %v141 = vld [vmem:[#allocation5 + $0x258] sm:$0xff]
    %v142 = vld [vmem:[#allocation5 + $0x260] sm:$0xff]
    %v143 = vld [vmem:[#allocation5 + $0x268] sm:$0xff]
    %v144 = vld [vmem:[#allocation5 + $0x270] sm:$0xff]
    %v145 = vld [vmem:[#allocation5 + $0x278] sm:$0xff]
    %v146 = vld [vmem:[#allocation5 + $0x280] sm:$0xff]
    %v147 = vld [vmem:[#allocation5 + $0x288] sm:$0xff]
    %v148 = vld [vmem:[#allocation5 + $0x290] sm:$0xff]
    %v149 = vld [vmem:[#allocation5 + $0x298] sm:$0xff]
    %v150 = vld [vmem:[#allocation5 + $0x2a0] sm:$0xff]
    %v151 = vld [vmem:[#allocation5 + $0x2a8] sm:$0xff]
    %v152 = vld [vmem:[#allocation5 + $0x2b0] sm:$0xff]
    %v153 = vld [vmem:[#allocation5 + $0x2b8] sm:$0xff]
    %v154 = vld [vmem:[#allocation5 + $0x2c0] sm:$0xff]
    %v155 = vld [vmem:[#allocation5 + $0x2c8] sm:$0xff]
    %v156 = vld [vmem:[#allocation5 + $0x2d0] sm:$0xff]
    %v157 = vld [vmem:[#allocation5 + $0x2d8] sm:$0xff]
    %v158 = vld [vmem:[#allocation5 + $0x2e0] sm:$0xff]
    %v159 = vld [vmem:[#allocation5 + $0x2e8] sm:$0xff]
    %v160 = vld [vmem:[#allocation5 + $0x2f0] sm:$0xff]
    %v161 = vld [vmem:[#allocation5 + $0x2f8] sm:$0xff]
    %v162 = vld [vmem:[#allocation5 + $0x300] sm:$0xff]
    %v163 = vld [vmem:[#allocation5 + $0x308] sm:$0xff]
    %v164 = vld [vmem:[#allocation5 + $0x310] sm:$0xff]
    %v165 = vld [vmem:[#allocation5 + $0x318] sm:$0xff]
    %v166 = vld [vmem:[#allocation5 + $0x320] sm:$0xff]
    %v167 = vld [vmem:[#allocation5 + $0x328] sm:$0xff]
    %v168 = vld [vmem:[#allocation5 + $0x330] sm:$0xff]
    %v169 = vld [vmem:[#allocation5 + $0x338] sm:$0xff]
    %v170 = vld [vmem:[#allocation5 + $0x340] sm:$0xff]
    %v171 = vld [vmem:[#allocation5 + $0x348] sm:$0xff]
    %v172 = vld [vmem:[#allocation5 + $0x350] sm:$0xff]
    %v173 = vld [vmem:[#allocation5 + $0x358] sm:$0xff]
    %v174 = vld [vmem:[#allocation5 + $0x360] sm:$0xff]
    %v175 = vld [vmem:[#allocation5 + $0x368] sm:$0xff]
    %v176 = vld [vmem:[#allocation5 + $0x370] sm:$0xff]
    %v177 = vld [vmem:[#allocation5 + $0x378] sm:$0xff]
    %v178 = vld [vmem:[#allocation5 + $0x380] sm:$0xff]
    %v179 = vld [vmem:[#allocation5 + $0x388] sm:$0xff]
    %v180 = vld [vmem:[#allocation5 + $0x390] sm:$0xff]
    %v181 = vld [vmem:[#allocation5 + $0x398] sm:$0xff]
    %v182 = vld [vmem:[#allocation5 + $0x3a0] sm:$0xff]
    %v183 = vld [vmem:[#allocation5 + $0x3a8] sm:$0xff]
    %v184 = vld [vmem:[#allocation5 + $0x3b0] sm:$0xff]
    %v185 = vld [vmem:[#allocation5 + $0x3b8] sm:$0xff]
    %v186 = vld [vmem:[#allocation5 + $0x3c0] sm:$0xff]
    %v187 = vld [vmem:[#allocation5 + $0x3c8] sm:$0xff]
    %v188 = vld [vmem:[#allocation5 + $0x3d0] sm:$0xff]
    %v189 = vld [vmem:[#allocation5 + $0x3d8] sm:$0xff]
    %v190 = vld [vmem:[#allocation5 + $0x3e0] sm:$0xff]
    %v191 = vld [vmem:[#allocation5 + $0x3e8] sm:$0xff]
    %v192 = vld [vmem:[#allocation5 + $0x3f0] sm:$0xff]
    %v193 = vld [vmem:[#allocation5 + $0x3f8] sm:$0xff]
    %194 = vmatpush.msra.mxu0 %v126
    %195 = vmatpush.msra.mxu0 %v122
    %196 = vmatpush.msra.mxu0 %v118
    %197 = vmatpush.msra.mxu0 %v114
    %198 = vmatpush.msra.mxu0 %v110
    %199 = vmatpush.msra.mxu0 %v106
    %200 = vmatpush.msra.mxu0 %v102
    %201 = vmatpush.msra.mxu0 %v98
    %202 = vmatpush.msra.mxu0 %v94
    %203 = vmatpush.msra.mxu0 %v90
    %204 = vmatpush.msra.mxu0 %v86
    %205 = vmatpush.msra.mxu0 %v82
    %206 = vmatpush.msra.mxu0 %v78
    %207 = vmatpush.msra.mxu0 %v74
    %208 = vmatpush.msra.mxu0 %v70
    %209 = vmatpush.msra.mxu0 %v66
    %210 = vmatmul.f32.gmra.mxu0 %v62
    %v211 = vpop.f32.mrf.mxu0
    %v212 = vadd.f32 0.0, %v211
    %213 = vmatmul.f32.gmra.mxu0 %v64
    %v214 = vpop.f32.mrf.mxu0
    %v215 = vadd.f32 0.0, %v214
    %216 = vdwg.mxu0
    %217 = vmatpush.msra.mxu0 %v190
    %218 = vmatpush.msra.mxu0 %v186
    %219 = vmatpush.msra.mxu0 %v182
    %220 = vmatpush.msra.mxu0 %v178
    %221 = vmatpush.msra.mxu0 %v174
    %222 = vmatpush.msra.mxu0 %v170
    %223 = vmatpush.msra.mxu0 %v166
    %224 = vmatpush.msra.mxu0 %v162
    %225 = vmatpush.msra.mxu0 %v158
    %226 = vmatpush.msra.mxu0 %v154
    %227 = vmatpush.msra.mxu0 %v150
    %228 = vmatpush.msra.mxu0 %v146
    %229 = vmatpush.msra.mxu0 %v142
    %230 = vmatpush.msra.mxu0 %v138
    %231 = vmatpush.msra.mxu0 %v134
    %232 = vmatpush.msra.mxu0 %v130
    %233 = vmatmul.f32.gmra.mxu0 %v63
    %v234 = vpop.f32.mrf.mxu0
    %v235 = vadd.f32 %v212, %v234
    %236 = vmatmul.f32.gmra.mxu0 %v65
    %v237 = vpop.f32.mrf.mxu0
    %v238 = vadd.f32 %v215, %v237
    %239 = vdwg.mxu0
    %240 = vmatpush.msra.mxu0 %v127
    %241 = vmatpush.msra.mxu0 %v123
    %242 = vmatpush.msra.mxu0 %v119
    %243 = vmatpush.msra.mxu0 %v115
    %244 = vmatpush.msra.mxu0 %v111
    %245 = vmatpush.msra.mxu0 %v107
    %246 = vmatpush.msra.mxu0 %v103
    %247 = vmatpush.msra.mxu0 %v99
    %248 = vmatpush.msra.mxu0 %v95
    %249 = vmatpush.msra.mxu0 %v91
    %250 = vmatpush.msra.mxu0 %v87
    %251 = vmatpush.msra.mxu0 %v83
    %252 = vmatpush.msra.mxu0 %v79
    %253 = vmatpush.msra.mxu0 %v75
    %254 = vmatpush.msra.mxu0 %v71
    %255 = vmatpush.msra.mxu0 %v67
    %256 = vmatmul.f32.gmra.mxu0 %v62
    %v257 = vpop.f32.mrf.mxu0
    %v258 = vadd.f32 0.0, %v257
    %259 = vmatmul.f32.gmra.mxu0 %v64
    %v260 = vpop.f32.mrf.mxu0
    %v261 = vadd.f32 0.0, %v260
    %262 = vdwg.mxu0
    %263 = vmatpush.msra.mxu0 %v191
    %264 = vmatpush.msra.mxu0 %v187
    %265 = vmatpush.msra.mxu0 %v183
    %266 = vmatpush.msra.mxu0 %v179
    %267 = vmatpush.msra.mxu0 %v175
    %268 = vmatpush.msra.mxu0 %v171
    %269 = vmatpush.msra.mxu0 %v167
    %270 = vmatpush.msra.mxu0 %v163
    %271 = vmatpush.msra.mxu0 %v159
    %272 = vmatpush.msra.mxu0 %v155
    %273 = vmatpush.msra.mxu0 %v151
    %274 = vmatpush.msra.mxu0 %v147
    %275 = vmatpush.msra.mxu0 %v143
    %276 = vmatpush.msra.mxu0 %v139
    %277 = vmatpush.msra.mxu0 %v135
    %278 = vmatpush.msra.mxu0 %v131
    %279 = vmatmul.f32.gmra.mxu0 %v63
    %v280 = vpop.f32.mrf.mxu0
    %v281 = vadd.f32 %v258, %v280
    %282 = vmatmul.f32.gmra.mxu0 %v65
    %v283 = vpop.f32.mrf.mxu0
    %v284 = vadd.f32 %v261, %v283
    %285 = vdwg.mxu0
    %286 = vmatpush.msra.mxu0 %v128
    %287 = vmatpush.msra.mxu0 %v124
    %288 = vmatpush.msra.mxu0 %v120
    %289 = vmatpush.msra.mxu0 %v116
    %290 = vmatpush.msra.mxu0 %v112
    %291 = vmatpush.msra.mxu0 %v108
    %292 = vmatpush.msra.mxu0 %v104
    %293 = vmatpush.msra.mxu0 %v100
    %294 = vmatpush.msra.mxu0 %v96
    %295 = vmatpush.msra.mxu0 %v92
    %296 = vmatpush.msra.mxu0 %v88
    %297 = vmatpush.msra.mxu0 %v84
    %298 = vmatpush.msra.mxu0 %v80
    %299 = vmatpush.msra.mxu0 %v76
    %300 = vmatpush.msra.mxu0 %v72
    %301 = vmatpush.msra.mxu0 %v68
    %302 = vmatmul.f32.gmra.mxu0 %v62
    %v303 = vpop.f32.mrf.mxu0
    %v304 = vadd.f32 0.0, %v303
    %305 = vmatmul.f32.gmra.mxu0 %v64
    %v306 = vpop.f32.mrf.mxu0
    %v307 = vadd.f32 0.0, %v306
    %308 = vdwg.mxu0
    %309 = vmatpush.msra.mxu0 %v192
    %310 = vmatpush.msra.mxu0 %v188
    %311 = vmatpush.msra.mxu0 %v184
    %312 = vmatpush.msra.mxu0 %v180
    %313 = vmatpush.msra.mxu0 %v176
    %314 = vmatpush.msra.mxu0 %v172
    %315 = vmatpush.msra.mxu0 %v168
    %316 = vmatpush.msra.mxu0 %v164
    %317 = vmatpush.msra.mxu0 %v160
    %318 = vmatpush.msra.mxu0 %v156
    %319 = vmatpush.msra.mxu0 %v152
    %320 = vmatpush.msra.mxu0 %v148
    %321 = vmatpush.msra.mxu0 %v144
    %322 = vmatpush.msra.mxu0 %v140
    %323 = vmatpush.msra.mxu0 %v136
    %324 = vmatpush.msra.mxu0 %v132
    %325 = vmatmul.f32.gmra.mxu0 %v63
    %v326 = vpop.f32.mrf.mxu0
    %v327 = vadd.f32 %v304, %v326
    %328 = vmatmul.f32.gmra.mxu0 %v65
    %v329 = vpop.f32.mrf.mxu0
    %v330 = vadd.f32 %v307, %v329
    %331 = vdwg.mxu0
    %332 = vmatpush.msra.mxu0 %v129
    %333 = vmatpush.msra.mxu0 %v125
    %334 = vmatpush.msra.mxu0 %v121
    %335 = vmatpush.msra.mxu0 %v117
    %336 = vmatpush.msra.mxu0 %v113
    %337 = vmatpush.msra.mxu0 %v109
    %338 = vmatpush.msra.mxu0 %v105
    %339 = vmatpush.msra.mxu0 %v101
    %340 = vmatpush.msra.mxu0 %v97
    %341 = vmatpush.msra.mxu0 %v93
    %342 = vmatpush.msra.mxu0 %v89
    %343 = vmatpush.msra.mxu0 %v85
    %344 = vmatpush.msra.mxu0 %v81
    %345 = vmatpush.msra.mxu0 %v77
    %346 = vmatpush.msra.mxu0 %v73
    %347 = vmatpush.msra.mxu0 %v69
    %348 = vmatmul.f32.gmra.mxu0 %v62
    %v349 = vpop.f32.mrf.mxu0
    %v350 = vadd.f32 0.0, %v349
    %351 = vmatmul.f32.gmra.mxu0 %v64
    %v352 = vpop.f32.mrf.mxu0
    %v353 = vadd.f32 0.0, %v352
    %354 = vdwg.mxu0
    %355 = vmatpush.msra.mxu0 %v193
    %356 = vmatpush.msra.mxu0 %v189
    %357 = vmatpush.msra.mxu0 %v185
    %358 = vmatpush.msra.mxu0 %v181
    %359 = vmatpush.msra.mxu0 %v177
    %360 = vmatpush.msra.mxu0 %v173
    %361 = vmatpush.msra.mxu0 %v169
    %362 = vmatpush.msra.mxu0 %v165
    %363 = vmatpush.msra.mxu0 %v161
    %364 = vmatpush.msra.mxu0 %v157
    %365 = vmatpush.msra.mxu0 %v153
    %366 = vmatpush.msra.mxu0 %v149
    %367 = vmatpush.msra.mxu0 %v145
    %368 = vmatpush.msra.mxu0 %v141
    %369 = vmatpush.msra.mxu0 %v137
    %370 = vmatpush.msra.mxu0 %v133
    %371 = vmatmul.f32.gmra.mxu0 %v63
    %v372 = vpop.f32.mrf.mxu0
    %v373 = vadd.f32 %v350, %v372
    %374 = vmatmul.f32.gmra.mxu0 %v65
    %v375 = vpop.f32.mrf.mxu0
    %v376 = vadd.f32 %v353, %v375
    %377 = vdwg.mxu0
    %v378 = vmax.f32 %v235, 0.0
    %v379 = vmax.f32 %v281, 0.0
    %v380 = vmax.f32 %v327, 0.0
    %v381 = vmax.f32 %v373, 0.0
    %v382 = vmax.f32 %v238, 0.0
    %v383 = vmax.f32 %v284, 0.0
    %v384 = vmax.f32 %v330, 0.0
    %v385 = vmax.f32 %v376, 0.0
    %v386 = vmul.f32 %v378, %v378
    %v387 = vmul.f32 %v379, %v379
    %v388 = vmul.f32 %v380, %v380
    %v389 = vmul.f32 %v381, %v381
    %v390 = vmul.f32 %v382, %v382
    %v391 = vmul.f32 %v383, %v383
    %v392 = vmul.f32 %v384, %v384
    %v393 = vmul.f32 %v385, %v385
    %v394 = vld [vmem:[#allocation7] sm:$0xff]
    %v395 = vld [vmem:[#allocation7 + $0x8] sm:$0xff]
    %v396 = vld [vmem:[#allocation7 + $0x10] sm:$0xff]
    %v397 = vld [vmem:[#allocation7 + $0x18] sm:$0xff]
    %v398 = vld [vmem:[#allocation7 + $0x20] sm:$0xff]
    %v399 = vld [vmem:[#allocation7 + $0x28] sm:$0xff]
    %v400 = vld [vmem:[#allocation7 + $0x30] sm:$0xff]
    %v401 = vld [vmem:[#allocation7 + $0x38] sm:$0xff]
    %v402 = vld [vmem:[#allocation7 + $0x40] sm:$0xff]
    %v403 = vld [vmem:[#allocation7 + $0x48] sm:$0xff]
    %v404 = vld [vmem:[#allocation7 + $0x50] sm:$0xff]
    %v405 = vld [vmem:[#allocation7 + $0x58] sm:$0xff]
    %v406 = vld [vmem:[#allocation7 + $0x60] sm:$0xff]
    %v407 = vld [vmem:[#allocation7 + $0x68] sm:$0xff]
    %v408 = vld [vmem:[#allocation7 + $0x70] sm:$0xff]
    %v409 = vld [vmem:[#allocation7 + $0x78] sm:$0xff]
    %v410 = vld [vmem:[#allocation7 + $0x80] sm:$0xff]
    %v411 = vld [vmem:[#allocation7 + $0x88] sm:$0xff]
    %v412 = vld [vmem:[#allocation7 + $0x90] sm:$0xff]
    %v413 = vld [vmem:[#allocation7 + $0x98] sm:$0xff]
    %v414 = vld [vmem:[#allocation7 + $0xa0] sm:$0xff]
    %v415 = vld [vmem:[#allocation7 + $0xa8] sm:$0xff]
    %v416 = vld [vmem:[#allocation7 + $0xb0] sm:$0xff]
    %v417 = vld [vmem:[#allocation7 + $0xb8] sm:$0xff]
    %v418 = vld [vmem:[#allocation7 + $0xc0] sm:$0xff]
    %v419 = vld [vmem:[#allocation7 + $0xc8] sm:$0xff]
    %v420 = vld [vmem:[#allocation7 + $0xd0] sm:$0xff]
    %v421 = vld [vmem:[#allocation7 + $0xd8] sm:$0xff]
    %v422 = vld [vmem:[#allocation7 + $0xe0] sm:$0xff]
    %v423 = vld [vmem:[#allocation7 + $0xe8] sm:$0xff]
    %v424 = vld [vmem:[#allocation7 + $0xf0] sm:$0xff]
    %v425 = vld [vmem:[#allocation7 + $0xf8] sm:$0xff]
    %v426 = vld [vmem:[#allocation7 + $0x100] sm:$0xff]
    %v427 = vld [vmem:[#allocation7 + $0x108] sm:$0xff]
    %v428 = vld [vmem:[#allocation7 + $0x110] sm:$0xff]
    %v429 = vld [vmem:[#allocation7 + $0x118] sm:$0xff]
    %v430 = vld [vmem:[#allocation7 + $0x120] sm:$0xff]
    %v431 = vld [vmem:[#allocation7 + $0x128] sm:$0xff]
    %v432 = vld [vmem:[#allocation7 + $0x130] sm:$0xff]
    %v433 = vld [vmem:[#allocation7 + $0x138] sm:$0xff]
    %v434 = vld [vmem:[#allocation7 + $0x140] sm:$0xff]
    %v435 = vld [vmem:[#allocation7 + $0x148] sm:$0xff]
    %v436 = vld [vmem:[#allocation7 + $0x150] sm:$0xff]
    %v437 = vld [vmem:[#allocation7 + $0x158] sm:$0xff]
    %v438 = vld [vmem:[#allocation7 + $0x160] sm:$0xff]
    %v439 = vld [vmem:[#allocation7 + $0x168] sm:$0xff]
    %v440 = vld [vmem:[#allocation7 + $0x170] sm:$0xff]
    %v441 = vld [vmem:[#allocation7 + $0x178] sm:$0xff]
    %v442 = vld [vmem:[#allocation7 + $0x180] sm:$0xff]
    %v443 = vld [vmem:[#allocation7 + $0x188] sm:$0xff]
    %v444 = vld [vmem:[#allocation7 + $0x190] sm:$0xff]
    %v445 = vld [vmem:[#allocation7 + $0x198] sm:$0xff]
    %v446 = vld [vmem:[#allocation7 + $0x1a0] sm:$0xff]
    %v447 = vld [vmem:[#allocation7 + $0x1a8] sm:$0xff]
    %v448 = vld [vmem:[#allocation7 + $0x1b0] sm:$0xff]
    %v449 = vld [vmem:[#allocation7 + $0x1b8] sm:$0xff]
    %v450 = vld [vmem:[#allocation7 + $0x1c0] sm:$0xff]
    %v451 = vld [vmem:[#allocation7 + $0x1c8] sm:$0xff]
    %v452 = vld [vmem:[#allocation7 + $0x1d0] sm:$0xff]
    %v453 = vld [vmem:[#allocation7 + $0x1d8] sm:$0xff]
    %v454 = vld [vmem:[#allocation7 + $0x1e0] sm:$0xff]
    %v455 = vld [vmem:[#allocation7 + $0x1e8] sm:$0xff]
    %v456 = vld [vmem:[#allocation7 + $0x1f0] sm:$0xff]
    %v457 = vld [vmem:[#allocation7 + $0x1f8] sm:$0xff]
    %v458 = vld [vmem:[#allocation7 + $0x200] sm:$0xff]
    %v459 = vld [vmem:[#allocation7 + $0x208] sm:$0xff]
    %v460 = vld [vmem:[#allocation7 + $0x210] sm:$0xff]
    %v461 = vld [vmem:[#allocation7 + $0x218] sm:$0xff]
    %v462 = vld [vmem:[#allocation7 + $0x220] sm:$0xff]
    %v463 = vld [vmem:[#allocation7 + $0x228] sm:$0xff]
    %v464 = vld [vmem:[#allocation7 + $0x230] sm:$0xff]
    %v465 = vld [vmem:[#allocation7 + $0x238] sm:$0xff]
    %v466 = vld [vmem:[#allocation7 + $0x240] sm:$0xff]
    %v467 = vld [vmem:[#allocation7 + $0x248] sm:$0xff]
    %v468 = vld [vmem:[#allocation7 + $0x250] sm:$0xff]
    %v469 = vld [vmem:[#allocation7 + $0x258] sm:$0xff]
    %v470 = vld [vmem:[#allocation7 + $0x260] sm:$0xff]
    %v471 = vld [vmem:[#allocation7 + $0x268] sm:$0xff]
    %v472 = vld [vmem:[#allocation7 + $0x270] sm:$0xff]
    %v473 = vld [vmem:[#allocation7 + $0x278] sm:$0xff]
    %v474 = vld [vmem:[#allocation7 + $0x280] sm:$0xff]
    %v475 = vld [vmem:[#allocation7 + $0x288] sm:$0xff]
    %v476 = vld [vmem:[#allocation7 + $0x290] sm:$0xff]
    %v477 = vld [vmem:[#allocation7 + $0x298] sm:$0xff]
    %v478 = vld [vmem:[#allocation7 + $0x2a0] sm:$0xff]
    %v479 = vld [vmem:[#allocation7 + $0x2a8] sm:$0xff]
    %v480 = vld [vmem:[#allocation7 + $0x2b0] sm:$0xff]
    %v481 = vld [vmem:[#allocation7 + $0x2b8] sm:$0xff]
    %v482 = vld [vmem:[#allocation7 + $0x2c0] sm:$0xff]
    %v483 = vld [vmem:[#allocation7 + $0x2c8] sm:$0xff]
    %v484 = vld [vmem:[#allocation7 + $0x2d0] sm:$0xff]
    %v485 = vld [vmem:[#allocation7 + $0x2d8] sm:$0xff]
    %v486 = vld [vmem:[#allocation7 + $0x2e0] sm:$0xff]
    %v487 = vld [vmem:[#allocation7 + $0x2e8] sm:$0xff]
    %v488 = vld [vmem:[#allocation7 + $0x2f0] sm:$0xff]
    %v489 = vld [vmem:[#allocation7 + $0x2f8] sm:$0xff]
    %v490 = vld [vmem:[#allocation7 + $0x300] sm:$0xff]
    %v491 = vld [vmem:[#allocation7 + $0x308] sm:$0xff]
    %v492 = vld [vmem:[#allocation7 + $0x310] sm:$0xff]
    %v493 = vld [vmem:[#allocation7 + $0x318] sm:$0xff]
    %v494 = vld [vmem:[#allocation7 + $0x320] sm:$0xff]
    %v495 = vld [vmem:[#allocation7 + $0x328] sm:$0xff]
    %v496 = vld [vmem:[#allocation7 + $0x330] sm:$0xff]
    %v497 = vld [vmem:[#allocation7 + $0x338] sm:$0xff]
    %v498 = vld [vmem:[#allocation7 + $0x340] sm:$0xff]
    %v499 = vld [vmem:[#allocation7 + $0x348] sm:$0xff]
    %v500 = vld [vmem:[#allocation7 + $0x350] sm:$0xff]
    %v501 = vld [vmem:[#allocation7 + $0x358] sm:$0xff]
    %v502 = vld [vmem:[#allocation7 + $0x360] sm:$0xff]
    %v503 = vld [vmem:[#allocation7 + $0x368] sm:$0xff]
    %v504 = vld [vmem:[#allocation7 + $0x370] sm:$0xff]
    %v505 = vld [vmem:[#allocation7 + $0x378] sm:$0xff]
    %v506 = vld [vmem:[#allocation7 + $0x380] sm:$0xff]
    %v507 = vld [vmem:[#allocation7 + $0x388] sm:$0xff]
    %v508 = vld [vmem:[#allocation7 + $0x390] sm:$0xff]
    %v509 = vld [vmem:[#allocation7 + $0x398] sm:$0xff]
    %v510 = vld [vmem:[#allocation7 + $0x3a0] sm:$0xff]
    %v511 = vld [vmem:[#allocation7 + $0x3a8] sm:$0xff]
    %v512 = vld [vmem:[#allocation7 + $0x3b0] sm:$0xff]
    %v513 = vld [vmem:[#allocation7 + $0x3b8] sm:$0xff]
    %v514 = vld [vmem:[#allocation7 + $0x3c0] sm:$0xff]
    %v515 = vld [vmem:[#allocation7 + $0x3c8] sm:$0xff]
    %v516 = vld [vmem:[#allocation7 + $0x3d0] sm:$0xff]
    %v517 = vld [vmem:[#allocation7 + $0x3d8] sm:$0xff]
    %v518 = vld [vmem:[#allocation7 + $0x3e0] sm:$0xff]
    %v519 = vld [vmem:[#allocation7 + $0x3e8] sm:$0xff]
    %v520 = vld [vmem:[#allocation7 + $0x3f0] sm:$0xff]
    %v521 = vld [vmem:[#allocation7 + $0x3f8] sm:$0xff]
    %522 = vmatpush.msra.mxu0 %v424
    %523 = vmatpush.msra.mxu0 %v422
    %524 = vmatpush.msra.mxu0 %v420
    %525 = vmatpush.msra.mxu0 %v418
    %526 = vmatpush.msra.mxu0 %v416
    %527 = vmatpush.msra.mxu0 %v414
    %528 = vmatpush.msra.mxu0 %v412
    %529 = vmatpush.msra.mxu0 %v410
    %530 = vmatpush.msra.mxu0 %v408
    %531 = vmatpush.msra.mxu0 %v406
    %532 = vmatpush.msra.mxu0 %v404
    %533 = vmatpush.msra.mxu0 %v402
    %534 = vmatpush.msra.mxu0 %v400
    %535 = vmatpush.msra.mxu0 %v398
    %536 = vmatpush.msra.mxu0 %v396
    %537 = vmatpush.msra.mxu0 %v394
    %538 = vmatmul.f32.gmra.mxu0 %v386
    %v539 = vpop.f32.mrf.mxu0
    %v540 = vadd.f32 0.0, %v539
    %541 = vmatmul.f32.gmra.mxu0 %v390
    %v542 = vpop.f32.mrf.mxu0
    %v543 = vadd.f32 0.0, %v542
    %544 = vdwg.mxu0
    %545 = vmatpush.msra.mxu0 %v456
    %546 = vmatpush.msra.mxu0 %v454
    %547 = vmatpush.msra.mxu0 %v452
    %548 = vmatpush.msra.mxu0 %v450
    %549 = vmatpush.msra.mxu0 %v448
    %550 = vmatpush.msra.mxu0 %v446
    %551 = vmatpush.msra.mxu0 %v444
    %552 = vmatpush.msra.mxu0 %v442
    %553 = vmatpush.msra.mxu0 %v440
    %554 = vmatpush.msra.mxu0 %v438
    %555 = vmatpush.msra.mxu0 %v436
    %556 = vmatpush.msra.mxu0 %v434
    %557 = vmatpush.msra.mxu0 %v432
    %558 = vmatpush.msra.mxu0 %v430
    %559 = vmatpush.msra.mxu0 %v428
    %560 = vmatpush.msra.mxu0 %v426
    %561 = vmatmul.f32.gmra.mxu0 %v387
    %v562 = vpop.f32.mrf.mxu0
    %v563 = vadd.f32 %v540, %v562
    %564 = vmatmul.f32.gmra.mxu0 %v391
    %v565 = vpop.f32.mrf.mxu0
    %v566 = vadd.f32 %v543, %v565
    %567 = vdwg.mxu0
    %568 = vmatpush.msra.mxu0 %v488
    %569 = vmatpush.msra.mxu0 %v486
    %570 = vmatpush.msra.mxu0 %v484
    %571 = vmatpush.msra.mxu0 %v482
    %572 = vmatpush.msra.mxu0 %v480
    %573 = vmatpush.msra.mxu0 %v478
    %574 = vmatpush.msra.mxu0 %v476
    %575 = vmatpush.msra.mxu0 %v474
    %576 = vmatpush.msra.mxu0 %v472
    %577 = vmatpush.msra.mxu0 %v470
    %578 = vmatpush.msra.mxu0 %v468
    %579 = vmatpush.msra.mxu0 %v466
    %580 = vmatpush.msra.mxu0 %v464
    %581 = vmatpush.msra.mxu0 %v462
    %582 = vmatpush.msra.mxu0 %v460
    %583 = vmatpush.msra.mxu0 %v458
    %584 = vmatmul.f32.gmra.mxu0 %v388
    %v585 = vpop.f32.mrf.mxu0
    %v586 = vadd.f32 %v563, %v585
    %587 = vmatmul.f32.gmra.mxu0 %v392
    %v588 = vpop.f32.mrf.mxu0
    %v589 = vadd.f32 %v566, %v588
    %590 = vdwg.mxu0
    %591 = vmatpush.msra.mxu0 %v520
    %592 = vmatpush.msra.mxu0 %v518
    %593 = vmatpush.msra.mxu0 %v516
    %594 = vmatpush.msra.mxu0 %v514
    %595 = vmatpush.msra.mxu0 %v512
    %596 = vmatpush.msra.mxu0 %v510
    %597 = vmatpush.msra.mxu0 %v508
    %598 = vmatpush.msra.mxu0 %v506
    %599 = vmatpush.msra.mxu0 %v504
    %600 = vmatpush.msra.mxu0 %v502
    %601 = vmatpush.msra.mxu0 %v500
    %602 = vmatpush.msra.mxu0 %v498
    %603 = vmatpush.msra.mxu0 %v496
    %604 = vmatpush.msra.mxu0 %v494
    %605 = vmatpush.msra.mxu0 %v492
    %606 = vmatpush.msra.mxu0 %v490
    %607 = vmatmul.f32.gmra.mxu0 %v389
    %v608 = vpop.f32.mrf.mxu0
    %v609 = vadd.f32 %v586, %v608
    %610 = vmatmul.f32.gmra.mxu0 %v393
    %v611 = vpop.f32.mrf.mxu0
    %v612 = vadd.f32 %v589, %v611
    %613 = vdwg.mxu0
    %614 = vmatpush.msra.mxu0 %v425
    %615 = vmatpush.msra.mxu0 %v423
    %616 = vmatpush.msra.mxu0 %v421
    %617 = vmatpush.msra.mxu0 %v419
    %618 = vmatpush.msra.mxu0 %v417
    %619 = vmatpush.msra.mxu0 %v415
    %620 = vmatpush.msra.mxu0 %v413
    %621 = vmatpush.msra.mxu0 %v411
    %622 = vmatpush.msra.mxu0 %v409
    %623 = vmatpush.msra.mxu0 %v407
    %624 = vmatpush.msra.mxu0 %v405
    %625 = vmatpush.msra.mxu0 %v403
    %626 = vmatpush.msra.mxu0 %v401
    %627 = vmatpush.msra.mxu0 %v399
    %628 = vmatpush.msra.mxu0 %v397
    %629 = vmatpush.msra.mxu0 %v395
    %630 = vmatmul.f32.gmra.mxu0 %v386
    %v631 = vpop.f32.mrf.mxu0
    %v632 = vadd.f32 0.0, %v631
    %633 = vmatmul.f32.gmra.mxu0 %v390
    %v634 = vpop.f32.mrf.mxu0
    %v635 = vadd.f32 0.0, %v634
    %636 = vdwg.mxu0
    %637 = vmatpush.msra.mxu0 %v457
    %638 = vmatpush.msra.mxu0 %v455
    %639 = vmatpush.msra.mxu0 %v453
    %640 = vmatpush.msra.mxu0 %v451
    %641 = vmatpush.msra.mxu0 %v449
    %642 = vmatpush.msra.mxu0 %v447
    %643 = vmatpush.msra.mxu0 %v445
    %644 = vmatpush.msra.mxu0 %v443
    %645 = vmatpush.msra.mxu0 %v441
    %646 = vmatpush.msra.mxu0 %v439
    %647 = vmatpush.msra.mxu0 %v437
    %648 = vmatpush.msra.mxu0 %v435
    %649 = vmatpush.msra.mxu0 %v433
    %650 = vmatpush.msra.mxu0 %v431
    %651 = vmatpush.msra.mxu0 %v429
    %652 = vmatpush.msra.mxu0 %v427
    %653 = vmatmul.f32.gmra.mxu0 %v387
    %v654 = vpop.f32.mrf.mxu0
    %v655 = vadd.f32 %v632, %v654
    %656 = vmatmul.f32.gmra.mxu0 %v391
    %v657 = vpop.f32.mrf.mxu0
    %v658 = vadd.f32 %v635, %v657
    %659 = vdwg.mxu0
    %660 = vmatpush.msra.mxu0 %v489
    %661 = vmatpush.msra.mxu0 %v487
    %662 = vmatpush.msra.mxu0 %v485
    %663 = vmatpush.msra.mxu0 %v483
    %664 = vmatpush.msra.mxu0 %v481
    %665 = vmatpush.msra.mxu0 %v479
    %666 = vmatpush.msra.mxu0 %v477
    %667 = vmatpush.msra.mxu0 %v475
    %668 = vmatpush.msra.mxu0 %v473
    %669 = vmatpush.msra.mxu0 %v471
    %670 = vmatpush.msra.mxu0 %v469
    %671 = vmatpush.msra.mxu0 %v467
    %672 = vmatpush.msra.mxu0 %v465
    %673 = vmatpush.msra.mxu0 %v463
    %674 = vmatpush.msra.mxu0 %v461
    %675 = vmatpush.msra.mxu0 %v459
    %676 = vmatmul.f32.gmra.mxu0 %v388
    %v677 = vpop.f32.mrf.mxu0
    %v678 = vadd.f32 %v655, %v677
    %679 = vmatmul.f32.gmra.mxu0 %v392
    %v680 = vpop.f32.mrf.mxu0
    %v681 = vadd.f32 %v658, %v680
    %682 = vdwg.mxu0
    %683 = vmatpush.msra.mxu0 %v521
    %684 = vmatpush.msra.mxu0 %v519
    %685 = vmatpush.msra.mxu0 %v517
    %686 = vmatpush.msra.mxu0 %v515
    %687 = vmatpush.msra.mxu0 %v513
    %688 = vmatpush.msra.mxu0 %v511
    %689 = vmatpush.msra.mxu0 %v509
    %690 = vmatpush.msra.mxu0 %v507
    %691 = vmatpush.msra.mxu0 %v505
    %692 = vmatpush.msra.mxu0 %v503
    %693 = vmatpush.msra.mxu0 %v501
    %694 = vmatpush.msra.mxu0 %v499
    %695 = vmatpush.msra.mxu0 %v497
    %696 = vmatpush.msra.mxu0 %v495
    %697 = vmatpush.msra.mxu0 %v493
    %698 = vmatpush.msra.mxu0 %v491
    %699 = vmatmul.f32.gmra.mxu0 %v389
    %v700 = vpop.f32.mrf.mxu0
    %v701 = vadd.f32 %v678, %v700
    %702 = vmatmul.f32.gmra.mxu0 %v393
    %v703 = vpop.f32.mrf.mxu0
    %v704 = vadd.f32 %v681, %v703
    %705 = vdwg.mxu0
    %706 = vst [vmem:[#allocation8] sm:$0xff] %v609
    %707 = vst [vmem:[#allocation8 + $0x8] sm:$0xff] %v701
    %708 = vst [vmem:[#allocation8 + $0x10] sm:$0xff] %v612
    %709 = vst [vmem:[#allocation8 + $0x18] sm:$0xff] %v704
    // Predicated region
    $region26: #{tpu_custom_call.1} parent=1 // pred_check
      _
    $region27: #{tpu_custom_call.1} parent=1 // pred_check_branch
      %711 = sbr.rel (0) target = $region29
    $region28: #{tpu_custom_call.1} parent=1 // pred_region
      %713 = vsyncadd [#allocation4], 0
      %s714 = sshll.u32 [#allocation8], 4
      %s715 = int_to_ptr.vmem [resolvable:$true] %s714
      %s716 = sshll.u32 %s3, 4
      %s717 = int_to_ptr.hbm [resolvable:$true] %s716
      %722 = dma.vmem_to_hbm [thread:$0]  %s715, 512, %s717, [#allocation4], 256, 256, 16
    $region29: #{tpu_custom_call.1} parent=1 // pred_fallthru
      _
    // Predicated region
    $region30: #{tpu_custom_call.1} parent=1 // pred_check
      _
    $region31: #{tpu_custom_call.1} parent=1 // pred_check_branch
      %724 = sbr.rel (0) target = $region33
    $region32: #{tpu_custom_call.1} parent=1 // pred_region
      %726 = dma.done [#allocation4], 512
    $region33: #{tpu_custom_call.1} parent=1 // pred_fallthru
      _
    %727 = vsyncpa [#allocation3], 1
    %728 = vsyncpa [#allocation6], 1
    %729 = vsyncpa [#allocation4], 1

</llo_original>
